<compile_context>
chip_gen: v7x
topology: tpu7x:2x2x1
jax: 0.10.0
libtpu: 0.0.40
codegen_flags: <defaults>
</compile_context>

<pallas_src>
import functools
import math

import jax
import jax.numpy as jnp
import numpy as np
from jax.experimental import pallas as pl
from jax.experimental.pallas import tpu as pltpu


def _pick_lanes(n: int) -> int:
    """Largest lane width (mult of 128) that keeps rows >= 8 (mult of 8 if possible)."""
    for cand in (1024, 512, 256, 128):
        if n % cand == 0 and (n // cand) >= 8 and (n // cand) % 8 == 0:
            return cand
    for cand in (1024, 512, 256, 128):
        if n % cand == 0 and (n // cand) >= 8:
            return cand
    return 128


def _surface_loss_kernel(idc_ref, p_ref, d_ref, out_ref, acc_ref, *,
                         tile_b, bsz, tile_rows, rows, blk_lanes, n_flat,
                         acc_rows, row_tiling, need_b_mask, need_tail_mask,
                         fold_out_lanes):
    del idc_ref  # Consumed only by the index_maps (channel gather).
    b = pl.program_id(0)
    j = pl.program_id(2)

    @pl.when(j == 0)
    def _():
        acc_ref[...] = jnp.zeros_like(acc_ref)

    # Cast to f32 in-kernel; inputs stay in their native dtype in HBM.
    pc = p_ref[...].astype(jnp.float32)
    dc = jnp.abs(d_ref[...].astype(jnp.float32))
    prod = pc * dc                                  # (tile_b, tile_rows, blk_lanes)

    if need_b_mask:
        bidx = jax.lax.broadcasted_iota(jnp.int32, prod.shape, 0)
        prod = jnp.where(b * tile_b + bidx < bsz, prod, jnp.float32(0.0))
    if need_tail_mask:
        if row_tiling:
            ridx = jax.lax.broadcasted_iota(jnp.int32, prod.shape, 1)
            prod = jnp.where(j * tile_rows + ridx < rows, prod, jnp.float32(0.0))
        else:
            lidx = jax.lax.broadcasted_iota(jnp.int32, prod.shape, 2)
            prod = jnp.where(j * blk_lanes + lidx < n_flat, prod, jnp.float32(0.0))

    # Fold batch, then groups of `acc_rows` rows, into the small accumulator
    # (pure VPU work, free under the HBM roofline).
    part = jnp.sum(prod, axis=0)                                   # (tile_rows, blk_lanes)
    part = part.reshape(tile_rows // acc_rows, acc_rows, blk_lanes)
    acc_ref[...] += jnp.sum(part, axis=0)                          # (acc_rows, blk_lanes)

    @pl.when(j == pl.num_programs(2) - 1)
    def _():
        acc = acc_ref[...]
        if fold_out_lanes:
            # Lane-group fold to a 128-wide, lane-dense partial output block.
            acc = jnp.sum(acc.reshape(acc_rows, blk_lanes // 128, 128), axis=1)
        out_ref[...] = acc


def surface_loss(probs: jax.Array, dist_maps: jax.Array, idc,
                 *, target_block_bytes: int = 2 * 1024 * 1024) -> jax.Array:
    """Computes mean(probs[:, idc] * |dist_maps[:, idc]|) with a Pallas TPU kernel."""
    assert probs.shape == dist_maps.shape, (
        f"Probs shape {probs.shape} must match dist_maps shape {dist_maps.shape}")
    bsz, chans, h, w = probs.shape

    idc_np = np.asarray(idc, dtype=np.int32).reshape(-1)
    assert idc_np.size >= 1, "idc must select at least one channel"
    assert (idc_np >= 0).all() and (idc_np < chans).all(), "idc channel index out of range"
    idc_arr = jnp.asarray(idc_np)
    ksel = int(idc_np.size)

    n = h * w
    total = bsz * ksel * n

    itemsize = max(jnp.dtype(probs.dtype).itemsize, jnp.dtype(dist_maps.dtype).itemsize)
    min_itemsize = min(jnp.dtype(probs.dtype).itemsize, jnp.dtype(dist_maps.dtype).itemsize)
    # Sub-32-bit dtypes pack 2/4 rows per sublane -> align row tiles accordingly.
    row_align = max(8, 32 // max(1, min_itemsize))
    budget_elems = max(row_align * 128, target_block_bytes // itemsize)

    row_tiling = (n % 128 == 0)
    if row_tiling:
        lanes = _pick_lanes(n)
        rows = n // lanes
        padded_rows = -(-rows // row_align) * row_align
        if padded_rows * lanes <= budget_elems:
            # Whole (b, c) slab fits: pack several batches per block.
            tile_rows = rows
            tile_b = int(min(bsz, max(1, budget_elems // (padded_rows * lanes))))
        else:
            tile_b = 1
            tile_rows = int(min(rows, max(row_align,
                                          (budget_elems // lanes) // row_align * row_align)))
        blk_lanes = lanes
        n_j = pl.cdiv(rows, tile_rows)
        need_tail_mask = (rows % tile_rows) != 0
    else:
        # H*W not a multiple of 128: single logical row, tile along the lane axis
        # with a 128-multiple block and mask the tail (VMEM-safe for large maps).
        # TODO(synk): padding H*W to a 128 multiple once in the wrapper would
        # recover full sublane utilisation for large odd-sized maps.
        rows, tile_rows = 1, 1
        lane_budget = max(128, (budget_elems // 8) // 128 * 128)  # /8: sublane padding
        if n <= lane_budget:
            blk_lanes = n
            per_slab = max(1, -(-n // 128) * 128)
            tile_b = int(min(bsz, max(1, (budget_elems // 8) // per_slab)))
        else:
            blk_lanes = lane_budget
            tile_b = 1
        lanes = n
        n_j = pl.cdiv(n, blk_lanes)
        need_tail_mask = (n % blk_lanes) != 0

    n_b = pl.cdiv(bsz, tile_b)
    need_b_mask = (bsz % tile_b) != 0
    acc_rows = math.gcd(tile_rows, 8)
    fold_out_lanes = (blk_lanes % 128 == 0) and (blk_lanes > 128)
    out_lanes = 128 if fold_out_lanes else blk_lanes

    # Free reshapes (contiguous data, no HBM copies).
    p4 = probs.reshape(bsz, chans, rows, lanes)
    d4 = dist_maps.reshape(bsz, chans, rows, lanes)

    kernel = functools.partial(
        _surface_loss_kernel,
        tile_b=tile_b, bsz=bsz, tile_rows=tile_rows, rows=rows,
        blk_lanes=blk_lanes, n_flat=n, acc_rows=acc_rows,
        row_tiling=row_tiling, need_b_mask=need_b_mask,
        need_tail_mask=need_tail_mask, fold_out_lanes=fold_out_lanes)

    # Channel gather happens here: the C block index comes from the prefetched
    # idc array (positional trailing arg to every index_map).
    if row_tiling:
        def in_map(b, k, j, idc_ref):
            return (b, idc_ref[k], j, 0)
    else:
        def in_map(b, k, j, idc_ref):
            return (b, idc_ref[k], 0, j)

    def out_map(b, k, j, idc_ref):
        return (b * ksel + k, 0, 0)

    ip = jnp.dtype(probs.dtype).itemsize
    idms = jnp.dtype(dist_maps.dtype).itemsize
    out_bytes = n_b * ksel * acc_rows * out_lanes * 4
    cost = pl.CostEstimate(
        flops=3 * total,
        transcendentals=0,
        bytes_accessed=total * (ip + idms) + out_bytes,
    )

    partials = pl.pallas_call(
        kernel,
        out_shape=jax.ShapeDtypeStruct((n_b * ksel, acc_rows, out_lanes), jnp.float32),
        grid_spec=pltpu.PrefetchScalarGridSpec(
            num_scalar_prefetch=1,
            grid=(n_b, ksel, n_j),
            in_specs=[
                pl.BlockSpec((tile_b, None, tile_rows, blk_lanes), in_map),
                pl.BlockSpec((tile_b, None, tile_rows, blk_lanes), in_map),
            ],
            out_specs=pl.BlockSpec((None, acc_rows, out_lanes), out_map),
            scratch_shapes=[pltpu.VMEM((acc_rows, blk_lanes), jnp.float32)],
        ),
        compiler_params=pltpu.CompilerParams(
            # Only the spatial axis (j) is a serial reduction; (b, k) blocks are
            # independent partial sums -> v7x can split them across TensorCores.
            dimension_semantics=("parallel", "parallel", "arbitrary"),
            vmem_limit_bytes=32 * 1024 * 1024,
        ),
        cost_estimate=cost,
    )(idc_arr, p4, d4)

    # Tiny final reduction of the per-(b, k) partials; mean = sum / count.
    return jnp.sum(partials) / total


def surface_loss_ref(probs, dist_maps, idc):
    idc = jnp.asarray(np.asarray(idc, dtype=np.int32))
    pc = jnp.take(probs, idc, axis=1).astype(jnp.float32)
    dc = jnp.abs(jnp.take(dist_maps, idc, axis=1).astype(jnp.float32))
    return jnp.mean(pc * dc)


if __name__ == "__main__":
    key = jax.random.PRNGKey(0)
    k1, k2 = jax.random.split(key)

    # Small shapes consistent with the module: B=2, C=4, H=W=16, idc selects 2 channels.
    B, C, H, W = 2, 4, 16, 16
    idc = [1, 3]

    probs = jax.nn.softmax(jax.random.normal(k1, (B, C, H, W), jnp.float32), axis=1)
    dist_maps = jax.random.normal(k2, (B, C, H, W), jnp.float32) * 3.0

    loss = jax.block_until_ready(surface_loss(probs, dist_maps, idc))
    ref = jax.block_until_ready(surface_loss_ref(probs, dist_maps, idc))

    assert jnp.allclose(loss, ref, rtol=1e-5, atol=1e-6), (loss, ref)
    print("KERNEL_OK")
</pallas_src>

<mosaic_0001>
module attributes {stable_mosaic.version = 11 : i64} {
  func.func @_surface_loss_kernel(%arg0: i32, %arg1: i32, %arg2: i32, %arg3: memref<2xi32, #tpu.memory_space<smem>>, %arg4: memref<2x1x2x128xf32, #tpu.memory_space<vmem>>, %arg5: memref<2x1x2x128xf32, #tpu.memory_space<vmem>>, %arg6: memref<1x2x128xf32, #tpu.memory_space<vmem>>, %arg7: memref<2x128xf32, #tpu.memory_space<vmem>>) attributes {dimension_semantics = [#tpu.dimension_semantics<parallel>, #tpu.dimension_semantics<parallel>, #tpu.dimension_semantics<arbitrary>], iteration_bounds = array<i64: 1, 2, 1>, scalar_prefetch = 1 : i64, scratch_operands = 1 : i64, tpu.core_type = #tpu.core_type<tc>, window_params = [{transform_indices = @transform_0, window_bounds = array<i64: 2, 1, 2, 128>}, {transform_indices = @transform_1, window_bounds = array<i64: 2, 1, 2, 128>}, {transform_indices = @transform_2, window_bounds = array<i64: 1, 2, 128>}]} {
    %c0_i32 = arith.constant 0 : i32
    %0 = arith.cmpi eq, %arg2, %c0_i32 : i32
    %1 = arith.extui %0 : i1 to i32
    %c0_i32_0 = arith.constant 0 : i32
    %2 = arith.cmpi ne, %1, %c0_i32_0 : i32
    scf.if %2 {
      %cst_15 = arith.constant 0.000000e+00 : f32
      %18 = vector.broadcast %cst_15 : f32 to vector<2x128xf32>
      %c0_16 = arith.constant 0 : index
      %c0_17 = arith.constant 0 : index
      %19 = vector.load %arg7[%c0_16, %c0_17] : memref<2x128xf32, #tpu.memory_space<vmem>>, vector<2x128xf32>
      tpu.vector_store %arg7[%c0_16, %c0_17], %18 {strides = array<i32>} : memref<2x128xf32, #tpu.memory_space<vmem>>, vector<2x128xf32>,
    } else {
    }
    %c0 = arith.constant 0 : index
    %c0_1 = arith.constant 0 : index
    %c0_2 = arith.constant 0 : index
    %c0_3 = arith.constant 0 : index
    %3 = vector.load %arg4[%c0, %c0_1, %c0_2, %c0_3] : memref<2x1x2x128xf32, #tpu.memory_space<vmem>>, vector<2x1x2x128xf32>
    %4 = vector.shape_cast %3 : vector<2x1x2x128xf32> to vector<2x2x128xf32>
    %c0_4 = arith.constant 0 : index
    %c0_5 = arith.constant 0 : index
    %c0_6 = arith.constant 0 : index
    %c0_7 = arith.constant 0 : index
    %5 = vector.load %arg5[%c0_4, %c0_5, %c0_6, %c0_7] : memref<2x1x2x128xf32, #tpu.memory_space<vmem>>, vector<2x1x2x128xf32>
    %6 = vector.shape_cast %5 : vector<2x1x2x128xf32> to vector<2x2x128xf32>
    %7 = math.absf %6 : vector<2x2x128xf32>
    %8 = arith.mulf %4, %7 : vector<2x2x128xf32>
    %cst = arith.constant dense<0.000000e+00> : vector<2x128xf32>
    %9 = vector.multi_reduction <add>, %8, %cst [0] : vector<2x2x128xf32> to vector<2x128xf32>
    %10 = vector.shape_cast %9 : vector<2x128xf32> to vector<1x2x128xf32>
    %c0_8 = arith.constant 0 : index
    %c0_9 = arith.constant 0 : index
    %11 = vector.load %arg7[%c0_8, %c0_9] : memref<2x128xf32, #tpu.memory_space<vmem>>, vector<2x128xf32>
    %cst_10 = arith.constant dense<0.000000e+00> : vector<2x128xf32>
    %12 = vector.multi_reduction <add>, %10, %cst_10 [0] : vector<1x2x128xf32> to vector<2x128xf32>
    %13 = arith.addf %11, %12 : vector<2x128xf32>
    %c0_11 = arith.constant 0 : index
    %c0_12 = arith.constant 0 : index
    %14 = vector.load %arg7[%c0_11, %c0_12] : memref<2x128xf32, #tpu.memory_space<vmem>>, vector<2x128xf32>
    tpu.vector_store %arg7[%c0_11, %c0_12], %13 {strides = array<i32>} : memref<2x128xf32, #tpu.memory_space<vmem>>, vector<2x128xf32>,
    %c0_i32_13 = arith.constant 0 : i32
    %15 = arith.cmpi eq, %arg2, %c0_i32_13 : i32
    %16 = arith.extui %15 : i1 to i32
    %c0_i32_14 = arith.constant 0 : i32
    %17 = arith.cmpi ne, %16, %c0_i32_14 : i32
    scf.if %17 {
      %c0_15 = arith.constant 0 : index
      %c0_16 = arith.constant 0 : index
      %18 = vector.load %arg7[%c0_15, %c0_16] : memref<2x128xf32, #tpu.memory_space<vmem>>, vector<2x128xf32>
      %c0_17 = arith.constant 0 : index
      %c0_18 = arith.constant 0 : index
      %c0_19 = arith.constant 0 : index
      %19 = vector.load %arg6[%c0_17, %c0_18, %c0_19] : memref<1x2x128xf32, #tpu.memory_space<vmem>>, vector<1x2x128xf32>
      %20 = vector.shape_cast %19 : vector<1x2x128xf32> to vector<2x128xf32>
      %21 = vector.shape_cast %18 : vector<2x128xf32> to vector<1x2x128xf32>
      tpu.vector_store %arg6[%c0_17, %c0_18, %c0_19], %21 {strides = array<i32>} : memref<1x2x128xf32, #tpu.memory_space<vmem>>, vector<1x2x128xf32>,
    } else {
    }
    return
  }
  func.func @transform_0(%arg0: i32, %arg1: i32, %arg2: i32, %arg3: memref<2xi32, #tpu.memory_space<smem>>) -> (i32, i32, i32, i32) {
    %0 = arith.index_cast %arg1 : i32 to index
    %1 = memref.load %arg3[%0] : memref<2xi32, #tpu.memory_space<smem>>
    %c0_i32 = arith.constant 0 : i32
    %c0_i32_0 = arith.constant 0 : i32
    return %arg0, %1, %arg2, %c0_i32 : i32, i32, i32, i32
  }
  func.func @transform_1(%arg0: i32, %arg1: i32, %arg2: i32, %arg3: memref<2xi32, #tpu.memory_space<smem>>) -> (i32, i32, i32, i32) {
    %0 = arith.index_cast %arg1 : i32 to index
    %1 = memref.load %arg3[%0] : memref<2xi32, #tpu.memory_space<smem>>
    %c0_i32 = arith.constant 0 : i32
    %c0_i32_0 = arith.constant 0 : i32
    return %arg0, %1, %arg2, %c0_i32 : i32, i32, i32, i32
  }
  func.func @transform_2(%arg0: i32, %arg1: i32, %arg2: i32, %arg3: memref<2xi32, #tpu.memory_space<smem>>) -> (i32, i32, i32) {
    %c2_i32 = arith.constant 2 : i32
    %0 = arith.muli %arg0, %c2_i32 : i32
    %1 = arith.addi %0, %arg1 : i32
    %c0_i32 = arith.constant 0 : i32
    %c0_i32_0 = arith.constant 0 : i32
    %c0_i32_1 = arith.constant 0 : i32
    return %1, %c0_i32, %c0_i32_0 : i32, i32, i32
  }
}

</mosaic_0001>

<llo_original>
// kernel: tpu_custom_call.1
$region0: #{tpu_custom_call.1}
  #allocation0 [shape = 'u32[]', space=smem, size = 0x4, offset = 0x4, fixed_abs, tag = 'smem constant byte address 0x4 - core index']
  #allocation1 [shape = 'u32[144,128]{1,0:T(1,128)}', space=vmem, size = 0x12000, scoped, tag = 'internal scratch']
  #allocation2 [shape = 'f32[2,128]{1,0:T(2,128)}', space=vmem, size = 0x400, scoped, tag = 'scratch operand']
  #allocation3 [shape = 's32[1]{0}', space=sflag, size = 0x4, scoped, tag = 'scoped memory for tpu_custom_call.1']
  #allocation4 [shape = 'u8[512]{0}', space=smem, size = 0x200, scoped, tag = 'prefetched SMEM operand 0']
  %s0 = inlined_call_operand.hbm [shape: s32[2], index: 0, kind: input, shape index: {}]
  %s1 = inlined_call_operand.hbm [shape: f32[2,4,2,128], index: 1, kind: input, shape index: {}]
  %s2 = inlined_call_operand.hbm [shape: f32[2,4,2,128], index: 2, kind: input, shape index: {}]
  %s3 = inlined_call_operand.hbm [shape: f32[2,2,128], index: 3, kind: output, shape index: {}]
  %s4 = sld [smem:[#allocation0]]
  $region57: #{tpu_custom_call.1} parent=0
    _
  %s6 = ssub.s32 1, %s4
  %s7 = scalar_select 0, %s6, %s4
  %9 = dma.hbm_to_smem %s0, 16, [#allocation4], [#allocation3]
  %10 = dma.done [#allocation3], 16
  %11 = sfence
  $region1: #{tpu_custom_call.1} parent=0
    #allocation5 [shape = 'u8[4096]{0}', space=vmem, size = 0x1000, scoped, tag = 'input window, operand 1']
    #allocation6 [shape = 's32[2]{0}', space=sflag, size = 0x8, scoped, tag = 'scoped memory for tpu_custom_call.1']
    #allocation7 [shape = 's32[2]{0}', space=sflag, size = 0x8, scoped, tag = 'scoped memory for tpu_custom_call.1']
    #allocation8 [shape = 'u8[4096]{0}', space=vmem, size = 0x1000, scoped, tag = 'input window, operand 2']
    #allocation9 [shape = 's32[2]{0}', space=sflag, size = 0x8, scoped, tag = 'scoped memory for tpu_custom_call.1']
    #allocation10 [shape = 'u8[2048]{0}', space=vmem, size = 0x800, scoped, tag = 'output window, operand 0']
    %12 = vsyncpa [#allocation6], 0
    %s13 = scalar_lea.sflag [#allocation6], 1
    %14 = vsyncpa %s13, 0
    %15 = vsyncpa [#allocation9], 0
    %s16 = scalar_lea.sflag [#allocation9], 1
    %17 = vsyncpa %s16, 0
    %18 = vsyncpa [#allocation7], 0
    %s19 = scalar_lea.sflag [#allocation7], 1
    %20 = vsyncpa %s19, 0
    loop: start=0, step=1, limit=4
    $region2: #{tpu_custom_call.1} parent=1 // loop_pre_header
      _
    $region3: #{tpu_custom_call.1} parent=1 // loop_header
      %s22 = sphi 0, %s26
      %p23 = scmp.ge.s32.totalorder %s22, 4
      %s29 = sphi 0, %s48
      %s30 = sphi 0, %s44
      %s31 = sphi 0, %s40
      %s32 = sphi 0, %s29
      %s33 = sphi 0, %s30
      %s34 = sphi 0, %s31
      %s35 = sphi 0, %s32
      %s36 = sphi 0, %s33
      %s37 = sphi 0, %s34
      %s57 = sphi 0, %s59
      %s60 = sphi 0, %s57
      %s61 = sphi 0, %s60
      %s77 = sphi 0, %s61
      %s89 = sphi 0, %s91
      %s92 = sphi 0, %s89
      %s93 = sphi 0, %s92
      %s109 = sphi 0, %s93
      %s119 = sphi 0, %s121
      %s122 = sphi 0, %s119
      %s123 = sphi 0, %s122
      %s139 = sphi 0, %s123
    $region4: #{tpu_custom_call.1} parent=1 // loop_header_branch
      %25 = sbr.rel (%p23) target = $region8
    $region5: #{tpu_custom_call.1} parent=1 // loop_body
      %s27 = ssub.s32 %s22, 1
      %s28 = ssub.s32 %s22, 2
      %s38 = sadd.s32 1, %s31
      %p39 = scmp.ge.s32.totalorder %s38, 1
      %s40 = scalar_select %p39, 0, %s38
      %s41 = sadd.s32 1, %s30
      %s42 = scalar_select %p39, %s41, %s30
      %p43 = scmp.ge.s32.totalorder %s42, 2
      %s44 = scalar_select %p43, 0, %s42
      %s45 = sadd.s32 1, %s29
      %s46 = scalar_select %p43, %s45, %s29
      %p47 = scmp.ge.s32.totalorder %s46, 1
      %s48 = scalar_select %p47, 0, %s46
      %s49 = sld [smem:[#allocation4 + %s30]]
      %s50 = sld [smem:[#allocation4 + %s44]]
      %s51 = ssub.s32 %s29, %s48
      %s52 = ssub.s32 %s49, %s50
      %s53 = sor.u32 %s51, %s52
      %s54 = ssub.s32 %s31, %s40
      %s55 = sor.u32 %s53, %s54
      %p56 = scmp.eq.s32.totalorder %s55, 0
      %s58 = sadd.s32 %s57, 1
      %s59 = scalar_select %p56, %s57, %s58
      %p62 = pneg %p56
      %p63 = scmp.eq.s32.totalorder %s22, 1
      %p64 = por %p62, %p63
      %p65 = scmp.ne.s32.totalorder %s57, %s60
      %p66 = scmp.eq.s32.totalorder %s22, 0
      %p67 = por %p65, %p66
      %p68 = scmp.ne.s32.totalorder %s57, %s60
      %p69 = scmp.eq.s32.totalorder %s27, 1
      %p70 = por %p68, %p69
      %p71 = scmp.ne.s32.totalorder %s60, %s61
      %p72 = scmp.eq.s32.totalorder %s27, 0
      %p73 = por %p71, %p72
      %p74 = scmp.ne.s32.totalorder %s60, %s61
      %p75 = scmp.eq.s32.totalorder %s28, 1
      %p76 = por %p74, %p75
      %p78 = scmp.ne.s32.totalorder %s61, %s77
      %p79 = scmp.eq.s32.totalorder %s28, 0
      %p80 = por %p78, %p79
      %s81 = sld [smem:[#allocation4 + %s30]]
      %s82 = sld [smem:[#allocation4 + %s44]]
      %s83 = ssub.s32 %s29, %s48
      %s84 = ssub.s32 %s81, %s82
      %s85 = sor.u32 %s83, %s84
      %s86 = ssub.s32 %s31, %s40
      %s87 = sor.u32 %s85, %s86
      %p88 = scmp.eq.s32.totalorder %s87, 0
      %s90 = sadd.s32 %s89, 1
      %s91 = scalar_select %p88, %s89, %s90
      %p94 = pneg %p88
      %p95 = scmp.eq.s32.totalorder %s22, 1
      %p96 = por %p94, %p95
      %p97 = scmp.ne.s32.totalorder %s89, %s92
      %p98 = scmp.eq.s32.totalorder %s22, 0
      %p99 = por %p97, %p98
      %p100 = scmp.ne.s32.totalorder %s89, %s92
      %p101 = scmp.eq.s32.totalorder %s27, 1
      %p102 = por %p100, %p101
      %p103 = scmp.ne.s32.totalorder %s92, %s93
      %p104 = scmp.eq.s32.totalorder %s27, 0
      %p105 = por %p103, %p104
      %p106 = scmp.ne.s32.totalorder %s92, %s93
      %p107 = scmp.eq.s32.totalorder %s28, 1
      %p108 = por %p106, %p107
      %p110 = scmp.ne.s32.totalorder %s93, %s109
      %p111 = scmp.eq.s32.totalorder %s28, 0
      %p112 = por %p110, %p111
      %s113 = smul.u32 %s29, 2
      %s114 = sadd.s32 %s113, %s30
      %s115 = smul.u32 %s48, 2
      %s116 = sadd.s32 %s115, %s44
      %s117 = ssub.s32 %s114, %s116
      %p118 = scmp.eq.s32.totalorder %s117, 0
      %s120 = sadd.s32 %s119, 1
      %s121 = scalar_select %p118, %s119, %s120
      %p124 = pneg %p118
      %p125 = scmp.eq.s32.totalorder %s22, 1
      %p126 = por %p124, %p125
      %p127 = scmp.ne.s32.totalorder %s119, %s122
      %p128 = scmp.eq.s32.totalorder %s22, 0
      %p129 = por %p127, %p128
      %p130 = scmp.ne.s32.totalorder %s119, %s122
      %p131 = scmp.eq.s32.totalorder %s27, 1
      %p132 = por %p130, %p131
      %p133 = scmp.ne.s32.totalorder %s122, %s123
      %p134 = scmp.eq.s32.totalorder %s27, 0
      %p135 = por %p133, %p134
      %p136 = scmp.ne.s32.totalorder %s122, %s123
      %p137 = scmp.eq.s32.totalorder %s28, 1
      %p138 = por %p136, %p137
      %p140 = scmp.ne.s32.totalorder %s123, %s139
      %p141 = scmp.eq.s32.totalorder %s28, 0
      %p142 = por %p140, %p141
      %p143 = scmp.le.s32.totalorder 1, %s22
      %p144 = scmp.lt.s32.totalorder %s22, 3
      %p145 = pnand %p143, %p144
      %p146 = pneg %p145
      // Predicated region
      $region9: #{tpu_custom_call.1} parent=5 // pred_check
        _
      $region10: #{tpu_custom_call.1} parent=5 // pred_check_branch
        %148 = sbr.rel (%p145) target = $region12
      $region11: #{tpu_custom_call.1} parent=5 // pred_region
        %s149 = ssub.s32 %s22, 1
      $region12: #{tpu_custom_call.1} parent=5 // pred_fallthru
        _
      %p150 = scmp.lt.s32.totalorder %s22, 2
      // Predicated region
      $region13: #{tpu_custom_call.1} parent=5 // pred_check
        %p151 = pneg %p150
      $region14: #{tpu_custom_call.1} parent=5 // pred_check_branch
        %153 = sbr.rel (%p151) target = $region16
      $region15: #{tpu_custom_call.1} parent=5 // pred_region
        // Predicated region
        $region17: #{tpu_custom_call.1} parent=15 // pred_check
          %p154 = pneg %p67
        $region18: #{tpu_custom_call.1} parent=15 // pred_check_branch
          %156 = sbr.rel (%p154) target = $region20
        $region19: #{tpu_custom_call.1} parent=15 // pred_region
          %s157 = sand.u32 %s57, 1
          %s158 = scalar_lea.sflag [#allocation6], %s157
          %s159 = sand.u32 %s57, 1
          %s160 = smul.addr %s159, 4
          %s161 = scalar_lea.vmem [#allocation5], %s160
          %s162 = sld [smem:[#allocation4 + %s30]]
          %s163 = smul.u32 2, %s29
          %s165 = ssub.s32 64, 64
          %166 = vsyncadd %s158, %s165
          %s167 = sadd.s32 %s31, %s162
          %s168 = smul.addr %s163, 4
          %s169 = sadd.s32 %s167, %s168
          %s170 = smul.addr %s169, 32
          %s171 = scalar_lea.hbm %s1, %s170
          %s172 = sshll.u32 %s161, 4
          %s173 = int_to_ptr.vmem [resolvable:$true] %s172
          %178 = dma.hbm_to_vmem [thread:$0]  %s171, 64, %s173, %s158, 128, 32, 2
        $region20: #{tpu_custom_call.1} parent=15 // pred_fallthru
          _
        // Predicated region
        $region21: #{tpu_custom_call.1} parent=15 // pred_check
          %p179 = pneg %p99
        $region22: #{tpu_custom_call.1} parent=15 // pred_check_branch
          %181 = sbr.rel (%p179) target = $region24
        $region23: #{tpu_custom_call.1} parent=15 // pred_region
          %s182 = sand.u32 %s89, 1
          %s183 = scalar_lea.sflag [#allocation9], %s182
          %s184 = sand.u32 %s89, 1
          %s185 = smul.addr %s184, 4
          %s186 = scalar_lea.vmem [#allocation8], %s185
          %s187 = sld [smem:[#allocation4 + %s30]]
          %s188 = smul.u32 2, %s29
          %s190 = ssub.s32 64, 64
          %191 = vsyncadd %s183, %s190
          %s192 = sadd.s32 %s31, %s187
          %s193 = smul.addr %s188, 4
          %s194 = sadd.s32 %s192, %s193
          %s195 = smul.addr %s194, 32
          %s196 = scalar_lea.hbm %s2, %s195
          %s197 = sshll.u32 %s186, 4
          %s198 = int_to_ptr.vmem [resolvable:$true] %s197
          %203 = dma.hbm_to_vmem [thread:$0]  %s196, 64, %s198, %s183, 128, 32, 2
        $region24: #{tpu_custom_call.1} parent=15 // pred_fallthru
          _
      $region16: #{tpu_custom_call.1} parent=5 // pred_fallthru
        _
      %p204 = scmp.le.s32.totalorder 1, %s22
      %p205 = scmp.lt.s32.totalorder %s22, 3
      %p206 = pnand %p204, %p205
      %p207 = pneg %p206
      // Predicated region
      $region25: #{tpu_custom_call.1} parent=5 // pred_check
        _
      $region26: #{tpu_custom_call.1} parent=5 // pred_check_branch
        %209 = sbr.rel (%p206) target = $region28
      $region27: #{tpu_custom_call.1} parent=5 // pred_region
        %s210 = ssub.s32 %s22, 1
        %s211 = sand.u32 %s60, 1
        %s212 = scalar_lea.sflag [#allocation6], %s211
        %s213 = sand.u32 %s60, 1
        %s214 = smul.addr %s213, 4
        %s215 = scalar_lea.vmem [#allocation5], %s214
        // Predicated region
        $region29: #{tpu_custom_call.1} parent=27 // pred_check
          %p216 = pneg %p73
        $region30: #{tpu_custom_call.1} parent=27 // pred_check_branch
          %218 = sbr.rel (%p216) target = $region32
        $region31: #{tpu_custom_call.1} parent=27 // pred_region
          %219 = dma.done %s212, 64
        $region32: #{tpu_custom_call.1} parent=27 // pred_fallthru
          _
        %s220 = sand.u32 %s92, 1
        %s221 = scalar_lea.sflag [#allocation9], %s220
        %s222 = sand.u32 %s92, 1
        %s223 = smul.addr %s222, 4
        %s224 = scalar_lea.vmem [#allocation8], %s223
        // Predicated region
        $region33: #{tpu_custom_call.1} parent=27 // pred_check
          %p225 = pneg %p105
        $region34: #{tpu_custom_call.1} parent=27 // pred_check_branch
          %227 = sbr.rel (%p225) target = $region36
        $region35: #{tpu_custom_call.1} parent=27 // pred_region
          %228 = dma.done %s221, 64
        $region36: #{tpu_custom_call.1} parent=27 // pred_fallthru
          _
        %s229 = sand.u32 %s60, 1
        %s230 = scalar_lea.sflag [#allocation6], %s229
        %s231 = sand.u32 %s60, 1
        %s232 = smul.addr %s231, 4
        %s233 = scalar_lea.vmem [#allocation5], %s232
        %p234 = pneg %p73
        %p235 = pneg %p70
        %s236 = sand.u32 %s92, 1
        %s237 = scalar_lea.sflag [#allocation9], %s236
        %s238 = sand.u32 %s92, 1
        %s239 = smul.addr %s238, 4
        %s240 = scalar_lea.vmem [#allocation8], %s239
        %p241 = pneg %p105
        %p242 = pneg %p102
        %p243 = pneg %p135
        %p244 = pneg %p132
        %s245 = sand.u32 %s122, 1
        %s246 = scalar_lea.sflag [#allocation7], %s245
        %s247 = sand.u32 %s122, 1
        %s248 = smul.addr %s247, 2
        %s249 = scalar_lea.vmem [#allocation10], %s248
        %s250 = sld [smem:[#allocation4 + %s33]]
        %s251 = smul.u32 2, %s32
        %s252 = sld [smem:[#allocation4 + %s33]]
        %s253 = smul.u32 2, %s32
        %s254 = smul.u32 %s32, 2
        %s255 = sadd.s32 %s254, %s33
        %p256 = scmp.eq.s32.totalorder %s34, 0
        // Predicated region
        $region37: #{tpu_custom_call.1} parent=27 // pred_check
          %p257 = pneg %p256
        $region38: #{tpu_custom_call.1} parent=27 // pred_check_branch
          %259 = sbr.rel (%p257) target = $region40
        $region39: #{tpu_custom_call.1} parent=27 // pred_region
          %260 = vst [vmem:[#allocation2] sm:$0x3] 0.0
        $region40: #{tpu_custom_call.1} parent=27 // pred_fallthru
          _
        %v261 = vld [vmem:[%s215] sm:$0x3]
        %v262 = vld [vmem:[%s215 + $0x2] sm:$0x3]
        %v263 = vld [vmem:[%s224] sm:$0x3]
        %v264 = vld [vmem:[%s224 + $0x2] sm:$0x3]
        %v265 = vand.u32 2147483647, %v263
        %v266 = vand.u32 2147483647, %v264
        %v267 = vmul.f32 %v261, %v265
        %v268 = vmul.f32 %v262, %v266
        %vm269 = vcmask 1041408
        %v270 = vsel %vm269, %v267, 0.0
        %v271 = vsel %vm269, %v268, 0.0
        %v272 = vadd.f32 %v270, %v271
        %v273 = vld [vmem:[#allocation2] sm:$0x3]
        %v274 = vadd.f32 %v272, 0.0
        %v275 = vadd.f32 %v273, %v274
        %276 = vst [vmem:[#allocation2] sm:$0x3] %v275
        // Predicated region
        $region41: #{tpu_custom_call.1} parent=27 // pred_check
          %p277 = pneg %p256
        $region42: #{tpu_custom_call.1} parent=27 // pred_check_branch
          %279 = sbr.rel (%p277) target = $region44
        $region43: #{tpu_custom_call.1} parent=27 // pred_region
          %v280 = vld [vmem:[#allocation2] sm:$0x3]
          %281 = vst [vmem:[%s249] sm:$0x3] %v280
        $region44: #{tpu_custom_call.1} parent=27 // pred_fallthru
          _
        %s282 = sand.u32 %s122, 1
        %s283 = scalar_lea.sflag [#allocation7], %s282
        %s284 = sand.u32 %s122, 1
        %s285 = smul.addr %s284, 2
        %s286 = scalar_lea.vmem [#allocation10], %s285
        // Predicated region
        $region45: #{tpu_custom_call.1} parent=27 // pred_check
          %p287 = pneg %p132
        $region46: #{tpu_custom_call.1} parent=27 // pred_check_branch
          %289 = sbr.rel (%p287) target = $region48
        $region47: #{tpu_custom_call.1} parent=27 // pred_region
          %s290 = smul.u32 %s32, 2
          %s291 = sadd.s32 %s290, %s33
          %s293 = ssub.s32 32, 32
          %294 = vsyncadd %s283, %s293
          %s295 = smul.addr %s291, 32
          %s296 = scalar_lea.hbm %s3, %s295
          %s298 = sshll.u32 %s286, 4
          %s299 = int_to_ptr.vmem [resolvable:$true] %s298
          %301 = dma.vmem_to_hbm [thread:$0]  %s299, 32, %s296, %s283
        $region48: #{tpu_custom_call.1} parent=27 // pred_fallthru
          _
      $region28: #{tpu_custom_call.1} parent=5 // pred_fallthru
        _
      %p302 = scmp.le.s32.totalorder 2, %s22
      // Predicated region
      $region49: #{tpu_custom_call.1} parent=5 // pred_check
        %p303 = pneg %p302
      $region50: #{tpu_custom_call.1} parent=5 // pred_check_branch
        %305 = sbr.rel (%p303) target = $region52
      $region51: #{tpu_custom_call.1} parent=5 // pred_region
        %s306 = ssub.s32 %s22, 2
        // Predicated region
        $region53: #{tpu_custom_call.1} parent=51 // pred_check
          %p307 = pneg %p138
        $region54: #{tpu_custom_call.1} parent=51 // pred_check_branch
          %309 = sbr.rel (%p307) target = $region56
        $region55: #{tpu_custom_call.1} parent=51 // pred_region
          %s310 = sand.u32 %s123, 1
          %s311 = scalar_lea.sflag [#allocation7], %s310
          %s312 = sand.u32 %s123, 1
          %s313 = smul.addr %s312, 2
          %s314 = scalar_lea.vmem [#allocation10], %s313
          %315 = dma.done %s311, 32
        $region56: #{tpu_custom_call.1} parent=51 // pred_fallthru
          _
      $region52: #{tpu_custom_call.1} parent=5 // pred_fallthru
        _
    $region6: #{tpu_custom_call.1} parent=1 // loop_footer
      %s26 = sadd.s32 1, %s22
    $region7: #{tpu_custom_call.1} parent=1 // loop_footer_branch
      %21 = sbr.rel target = $region3
    $region8: #{tpu_custom_call.1} parent=1 // loop_exit
      _
    %316 = vsyncpa [#allocation6], 1
    %s317 = scalar_lea.sflag [#allocation6], 1
    %318 = vsyncpa %s317, 1
    %319 = vsyncpa [#allocation9], 1
    %s320 = scalar_lea.sflag [#allocation9], 1
    %321 = vsyncpa %s320, 1
    %322 = vsyncpa [#allocation7], 1
    %s323 = scalar_lea.sflag [#allocation7], 1
    %324 = vsyncpa %s323, 1

</llo_original>
